<compile_context>
chip_gen: v6e
topology: v6e:2x2x1
jax: 0.10.0
libtpu: 0.0.40
codegen_flags: <defaults>
</compile_context>

<pallas_src>
import math

import jax
import jax.numpy as jnp
from jax.experimental import pallas as pl
from jax.experimental.pallas import tpu as pltpu


def _round_up(x: int, m: int) -> int:
    return ((x + m - 1) // m) * m


def _vmem_capacity_bytes() -> int:
    try:
        info = pltpu.get_tpu_info()
        cap = getattr(info, "vmem_capacity_bytes", None)
        if cap:
            return int(cap)
    except Exception:
        pass
    # Conservative default (v7x per-TC VMEM); v5e/v6e have 128 MiB.
    return 64 * 1024 * 1024


def _pad_cast_2d(a, rows, cols, dtype):
    """Cast/pad only when needed so already-prepared operands cost nothing."""
    if a.dtype != dtype:
        a = a.astype(dtype)
    r, c = a.shape
    if r != rows or c != cols:
        a = jnp.pad(a, ((0, rows - r), (0, cols - c)))
    return a


def _make_linear_kernel(has_bias: bool, direct_out: bool):
    """Streamed (rows, out-cols, reduction) matmul kernel.

    direct_out: output dtype is f32 -> accumulate straight into o_ref (no scratch).
    has_bias:   a bias ref is present and added on the last reduction step.
    """

    def kernel(*refs):
        if has_bias:
            x_ref, w_ref, b_ref = refs[0], refs[1], refs[2]
            o_ref = refs[3]
        else:
            x_ref, w_ref = refs[0], refs[1]
            b_ref = None
            o_ref = refs[2]
        acc_ref = o_ref if direct_out else refs[-1]

        k = pl.program_id(2)
        nk = pl.num_programs(2)

        part = jnp.dot(x_ref[...], w_ref[...], preferred_element_type=jnp.float32)

        @pl.when(k == 0)
        def _first():
            acc_ref[...] = part            # overwrite: no zero-init pass needed

        @pl.when(k != 0)
        def _rest():
            acc_ref[...] += part

        if has_bias or not direct_out:
            @pl.when(k == nk - 1)
            def _finalize():
                res = acc_ref[...]
                if has_bias:
                    res = res + b_ref[...]          # f32 broadcast add (VPU)
                o_ref[...] = res.astype(o_ref.dtype)

    return kernel


def pallas_linear(x, weight_t, bias=None, *, tm=1024, tn=1024, tk=1024,
                  compute_dtype=None, out_dtype=None,
                  allow_weight_resident=True):
    """y = x @ weight_t + bias, tiled over (rows, out-cols, reduction)."""
    orig_shape = x.shape
    D_in = orig_shape[-1]
    x2 = x.reshape(-1, D_in)
    N = x2.shape[0]

    D_in_w, D_out = weight_t.shape
    assert D_in == D_in_w, (D_in, D_in_w)

    if out_dtype is None:
        out_dtype = x.dtype
    if compute_dtype is None:
        # bf16 operands by default for float inputs: big MXU/HBM win, sums stay f32.
        compute_dtype = (jnp.bfloat16 if jnp.issubdtype(x.dtype, jnp.floating)
                         else x.dtype)

    has_bias = bias is not None
    direct_out = jnp.dtype(out_dtype) == jnp.dtype(jnp.float32)

    bpe = jnp.dtype(compute_dtype).itemsize
    obe = jnp.dtype(out_dtype).itemsize
    cap = _vmem_capacity_bytes()

    K128 = _round_up(D_in, 128)
    D128 = _round_up(D_out, 128)

    # Tile clamp. Sublane alignment: 16 covers both f32 (8) and bf16 (16) packing;
    # lane alignment: 128.
    tm = max(16, _round_up(min(tm, _round_up(N, 16)), 16))
    tn = max(128, _round_up(min(tn, D128), 128))
    tk = max(128, _round_up(min(tk, K128), 128))

    # Weight-resident fast path: whole (padded) weight panel as one block
    # (constant block index -> DMA'd exactly once for the whole grid).
    if allow_weight_resident and 2 * K128 * D128 * bpe <= int(0.45 * cap):
        tk, tn = K128, D128

    # Fit the x / output tiles (and accumulator) next to the weight tiles.
    budget = int(0.75 * cap)

    def _need(tm_):
        return (2 * tk * tn * bpe                    # double-buffered weight tiles
                + 2 * tm_ * tk * bpe                 # double-buffered x tiles
                + 2 * tm_ * tn * obe                 # output tiles
                + (0 if direct_out else tm_ * tn * 4)  # f32 accumulator scratch
                + 2 * D128 * 4)                      # bias

    while _need(tm) > budget and tm > 16:
        tm = max(16, _round_up(tm // 2, 16))

    Np = _round_up(N, tm)
    Kp = _round_up(D_in, tk)
    Dp = _round_up(D_out, tn)
    grid = (Np // tm, Dp // tn, Kp // tk)

    # v7x has 2 TensorCores sharded across the "parallel" axes: expose >= 2 row
    # blocks when it is free (only when the reduction/col axes are single blocks,
    # so the weight is still only DMA'd once).
    if grid[0] * grid[1] == 1 and grid[2] == 1 and N > 16:
        tm = _round_up(-(-N // 2), 16)
        Np = _round_up(N, tm)
        grid = (Np // tm, Dp // tn, Kp // tk)

    # Operand preparation (no-op when already aligned / already in compute dtype;
    # store weights pre-cast/pre-padded to keep this out of the hot path).
    x_p = _pad_cast_2d(x2, Np, Kp, compute_dtype)
    w_p = _pad_cast_2d(weight_t, Kp, Dp, compute_dtype)

    in_specs = [
        pl.BlockSpec((tm, tk), lambda i, j, k: (i, k)),   # x tile
        pl.BlockSpec((tk, tn), lambda i, j, k: (k, j)),   # weight tile
    ]
    operands = [x_p, w_p]
    if has_bias:
        b_p = _pad_cast_2d(bias.reshape(1, D_out), 1, Dp, jnp.float32)
        if tn == Dp:
            # Single block + constant index map -> loaded once for the whole grid.
            in_specs.append(pl.BlockSpec((1, Dp), lambda i, j, k: (0, 0)))
        else:
            # Tiny (1, tn) tile; block index only changes when j changes.
            in_specs.append(pl.BlockSpec((1, tn), lambda i, j, k: (0, j)))
        operands.append(b_p)

    scratch_shapes = [] if direct_out else [pltpu.VMEM((tm, tn), jnp.float32)]

    ni, nj, nk = grid
    x_traffic = Np * Kp * bpe * (1 if nk == 1 else nj)
    w_traffic = Kp * Dp * bpe * (1 if (nj == 1 and nk == 1) else ni)
    cost = pl.CostEstimate(
        flops=2 * Np * Dp * Kp,
        transcendentals=0,
        bytes_accessed=int(x_traffic + w_traffic + Dp * 4 + Np * Dp * obe),
    )

    vmem_limit = int(min(int(0.9 * cap), max(32 * 1024 * 1024, 2 * _need(tm))))

    kernel = _make_linear_kernel(has_bias, direct_out)

    out_p = pl.pallas_call(
        kernel,
        out_shape=jax.ShapeDtypeStruct((Np, Dp), out_dtype),
        grid_spec=pltpu.PrefetchScalarGridSpec(
            num_scalar_prefetch=0,
            grid=grid,
            in_specs=in_specs,
            out_specs=pl.BlockSpec((tm, tn), lambda i, j, k: (i, j)),
            scratch_shapes=scratch_shapes,
        ),
        compiler_params=pltpu.CompilerParams(
            dimension_semantics=("parallel", "parallel", "arbitrary"),
            vmem_limit_bytes=vmem_limit,
        ),
        cost_estimate=cost,
    )(*operands)

    out = out_p[:N, :D_out]
    return out.reshape(orig_shape[:-1] + (D_out,))


def init_linear_params(key, in_dim, out_dim, bias=True):
    """PyG Linear(weight_initializer='kaiming_uniform', bias_initializer='zeros'):
    kaiming_uniform with a=sqrt(5) over fan_in -> bound = 1/sqrt(fan_in)."""
    bound = 1.0 / math.sqrt(in_dim)
    # PyTorch stores (out_dim, in_dim); we keep the transposed (in_dim, out_dim).
    w = jax.random.uniform(
        key, (out_dim, in_dim), minval=-bound, maxval=bound, dtype=jnp.float32
    )
    weight_t = jnp.transpose(w)
    b = jnp.zeros((1, out_dim), dtype=jnp.float32) if bias else None
    return weight_t, b


if __name__ == "__main__":
    key = jax.random.PRNGKey(0)
    k_x, k_w, k_x3, k_w3 = jax.random.split(key, 4)

    # Small shapes; N deliberately NOT a tile multiple, D_out lane-sparse
    # (padded to 128 internally so stores stay lane-dense).
    N, D_in, D_out = 200, 64, 32
    x = jax.random.normal(k_x, (N, D_in), dtype=jnp.float32)
    weight_t, bias = init_linear_params(k_w, D_in, D_out, bias=True)
    y_ref = x @ weight_t + bias

    # Default path: bf16 MXU operands, f32 accumulation directly into o_ref.
    y = jax.block_until_ready(pallas_linear(x, weight_t, bias))
    assert y.shape == (N, D_out)
    assert jnp.allclose(y, y_ref, atol=5e-2, rtol=5e-2)

    # Forced f32-operand path (tight numerical check).
    y_f32 = jax.block_until_ready(
        pallas_linear(x, weight_t, bias, compute_dtype=jnp.float32))
    assert jnp.allclose(y_f32, y_ref, atol=1e-5, rtol=1e-5)

    # bias=False path (compiles the bias-free kernel variant).
    w2, b2 = init_linear_params(k_w, D_in, D_out, bias=False)
    y2 = jax.block_until_ready(
        pallas_linear(x, w2, b2, compute_dtype=jnp.float32))
    assert jnp.allclose(y2, x @ w2, atol=1e-5, rtol=1e-5)

    # Streamed multi-tile path (nk>1, nj>1) with bf16 output -> uses the f32
    # VMEM accumulator scratch and the per-j bias tile.
    N3, D_in3, D_out3 = 64, 256, 256
    x3 = jax.random.normal(k_x3, (N3, D_in3), dtype=jnp.float32)
    w3, b3 = init_linear_params(k_w3, D_in3, D_out3, bias=True)
    y3 = jax.block_until_ready(
        pallas_linear(x3, w3, b3, tm=32, tn=128, tk=128,
                      out_dtype=jnp.bfloat16, allow_weight_resident=False))
    y3_ref = x3 @ w3 + b3
    assert y3.shape == (N3, D_out3)
    assert jnp.allclose(y3.astype(jnp.float32), y3_ref, atol=6e-2, rtol=6e-2)

    print("KERNEL_OK")
</pallas_src>

<mosaic_0001>
module attributes {stable_mosaic.version = 11 : i64} {
  func.func @kernel(%arg0: i32, %arg1: i32, %arg2: i32, %arg3: memref<112x128xbf16, #tpu.memory_space<vmem>>, %arg4: memref<128x128xbf16, #tpu.memory_space<vmem>>, %arg5: memref<1x128xf32, #tpu.memory_space<vmem>>, %arg6: memref<112x128xf32, #tpu.memory_space<vmem>>) attributes {dimension_semantics = [#tpu.dimension_semantics<parallel>, #tpu.dimension_semantics<parallel>, #tpu.dimension_semantics<arbitrary>], iteration_bounds = array<i64: 2, 1, 1>, scalar_prefetch = 0 : i64, scratch_operands = 0 : i64, tpu.core_type = #tpu.core_type<tc>, window_params = [{transform_indices = @transform_0, window_bounds = array<i64: 112, 128>}, {transform_indices = @transform_1, window_bounds = array<i64: 128, 128>}, {pipeline_mode = #tpu.pipeline_mode<synchronous>, transform_indices = @transform_2, window_bounds = array<i64: 1, 128>}, {transform_indices = @transform_3, window_bounds = array<i64: 112, 128>}]} {
    %c0 = arith.constant 0 : index
    %c0_0 = arith.constant 0 : index
    %0 = vector.load %arg3[%c0, %c0_0] : memref<112x128xbf16, #tpu.memory_space<vmem>>, vector<112x128xbf16>
    %c0_1 = arith.constant 0 : index
    %c0_2 = arith.constant 0 : index
    %1 = vector.load %arg4[%c0_1, %c0_2] : memref<128x128xbf16, #tpu.memory_space<vmem>>, vector<128x128xbf16>
    %cst = arith.constant dense<0.000000e+00> : vector<112x128xf32>
    %2 = tpu.matmul %0, %1, %cst {dimension_numbers = #tpu.dot_dimension_numbers<[1], [0], [0], [1], [0, 0, 1, 1], [], []>} : vector<112x128xbf16>, vector<128x128xbf16>, vector<112x128xf32> -> vector<112x128xf32>
    %c0_i32 = arith.constant 0 : i32
    %3 = arith.cmpi eq, %arg2, %c0_i32 : i32
    %4 = arith.extui %3 : i1 to i32
    %c0_i32_3 = arith.constant 0 : i32
    %5 = arith.cmpi ne, %4, %c0_i32_3 : i32
    scf.if %5 {
      %c0_8 = arith.constant 0 : index
      %c0_9 = arith.constant 0 : index
      %12 = vector.load %arg6[%c0_8, %c0_9] : memref<112x128xf32, #tpu.memory_space<vmem>>, vector<112x128xf32>
      tpu.vector_store %arg6[%c0_8, %c0_9], %2 {strides = array<i32>} : memref<112x128xf32, #tpu.memory_space<vmem>>, vector<112x128xf32>,
    } else {
    }
    %c0_i32_4 = arith.constant 0 : i32
    %6 = arith.cmpi ne, %arg2, %c0_i32_4 : i32
    %7 = arith.extui %6 : i1 to i32
    %c0_i32_5 = arith.constant 0 : i32
    %8 = arith.cmpi ne, %7, %c0_i32_5 : i32
    scf.if %8 {
      %c0_8 = arith.constant 0 : index
      %c0_9 = arith.constant 0 : index
      %12 = vector.load %arg6[%c0_8, %c0_9] : memref<112x128xf32, #tpu.memory_space<vmem>>, vector<112x128xf32>
      %13 = arith.addf %12, %2 : vector<112x128xf32>
      %c0_10 = arith.constant 0 : index
      %c0_11 = arith.constant 0 : index
      %14 = vector.load %arg6[%c0_10, %c0_11] : memref<112x128xf32, #tpu.memory_space<vmem>>, vector<112x128xf32>
      tpu.vector_store %arg6[%c0_10, %c0_11], %13 {strides = array<i32>} : memref<112x128xf32, #tpu.memory_space<vmem>>, vector<112x128xf32>,
    } else {
    }
    %c0_i32_6 = arith.constant 0 : i32
    %9 = arith.cmpi eq, %arg2, %c0_i32_6 : i32
    %10 = arith.extui %9 : i1 to i32
    %c0_i32_7 = arith.constant 0 : i32
    %11 = arith.cmpi ne, %10, %c0_i32_7 : i32
    scf.if %11 {
      %c0_8 = arith.constant 0 : index
      %c0_9 = arith.constant 0 : index
      %12 = vector.load %arg6[%c0_8, %c0_9] : memref<112x128xf32, #tpu.memory_space<vmem>>, vector<112x128xf32>
      %c0_10 = arith.constant 0 : index
      %c0_11 = arith.constant 0 : index
      %13 = vector.load %arg5[%c0_10, %c0_11] : memref<1x128xf32, #tpu.memory_space<vmem>>, vector<1x128xf32>
      %14 = vector.broadcast %13 : vector<1x128xf32> to vector<112x128xf32>
      %15 = arith.addf %12, %14 : vector<112x128xf32>
      %c0_12 = arith.constant 0 : index
      %c0_13 = arith.constant 0 : index
      %16 = vector.load %arg6[%c0_12, %c0_13] : memref<112x128xf32, #tpu.memory_space<vmem>>, vector<112x128xf32>
      tpu.vector_store %arg6[%c0_12, %c0_13], %15 {strides = array<i32>} : memref<112x128xf32, #tpu.memory_space<vmem>>, vector<112x128xf32>,
    } else {
    }
    return
  }
  func.func @transform_0(%arg0: i32, %arg1: i32, %arg2: i32) -> (i32, i32) {
    %c0_i32 = arith.constant 0 : i32
    return %arg0, %arg2 : i32, i32
  }
  func.func @transform_1(%arg0: i32, %arg1: i32, %arg2: i32) -> (i32, i32) {
    %c0_i32 = arith.constant 0 : i32
    return %arg2, %arg1 : i32, i32
  }
  func.func @transform_2(%arg0: i32, %arg1: i32, %arg2: i32) -> (i32, i32) {
    %c0_i32 = arith.constant 0 : i32
    %c0_i32_0 = arith.constant 0 : i32
    %c0_i32_1 = arith.constant 0 : i32
    return %c0_i32, %c0_i32_0 : i32, i32
  }
  func.func @transform_3(%arg0: i32, %arg1: i32, %arg2: i32) -> (i32, i32) {
    %c0_i32 = arith.constant 0 : i32
    return %arg0, %arg1 : i32, i32
  }
}

</mosaic_0001>

<llo_original>
// kernel: tpu_custom_call.1
$region0: #{tpu_custom_call.1}
  #allocation0 [shape = 'u32[]', space=smem, size = 0x4, offset = 0x4, fixed_abs, tag = 'smem constant byte address 0x4 - core index']
  #allocation1 [shape = 'u32[144,128]{1,0:T(1,128)}', space=vmem, size = 0x12000, scoped, tag = 'internal scratch']
  %s0 = inlined_call_operand.hbm [shape: bf16[224,128], index: 0, kind: input, shape index: {}]
  %s1 = inlined_call_operand.hbm [shape: bf16[128,128], index: 1, kind: input, shape index: {}]
  %s2 = inlined_call_operand.vmem [shape: f32[1,128], index: 2, kind: input, shape index: {}]
  %s3 = inlined_call_operand.hbm [shape: f32[224,128], index: 3, kind: output, shape index: {}]
  %s4 = sld [smem:[#allocation0]]
  $region65: #{tpu_custom_call.1} parent=0
    _
  %s6 = ssub.s32 1, %s4
  %s7 = scalar_select 0, %s6, %s4
  $region1: #{tpu_custom_call.1} parent=0
    #allocation2 [shape = 'u8[57344]{0}', space=vmem, size = 0xe000, scoped, tag = 'input window, operand 0']
    #allocation3 [shape = 's32[2]{0}', space=sflag, size = 0x8, scoped, tag = 'scoped memory for tpu_custom_call.1']
    #allocation4 [shape = 's32[2]{0}', space=sflag, size = 0x8, scoped, tag = 'scoped memory for tpu_custom_call.1']
    #allocation5 [shape = 'u8[32768]{0}', space=vmem, size = 0x8000, scoped, tag = 'input window, operand 1, single buffered']
    #allocation6 [shape = 's32[1]{0}', space=sflag, size = 0x4, scoped, tag = 'scoped memory for tpu_custom_call.1']
    #allocation7 [shape = 'u8[114688]{0}', space=vmem, size = 0x1c000, scoped, tag = 'output window, operand 0']
    %8 = vsyncpa [#allocation3], 0
    %s9 = scalar_lea.sflag [#allocation3], 1
    %10 = vsyncpa %s9, 0
    %11 = vsyncpa [#allocation6], 0
    %12 = vsyncpa [#allocation4], 0
    %s13 = scalar_lea.sflag [#allocation4], 1
    %14 = vsyncpa %s13, 0
    loop: start=0, step=1, limit=4
    $region2: #{tpu_custom_call.1} parent=1 // loop_pre_header
      _
    $region3: #{tpu_custom_call.1} parent=1 // loop_header
      %s16 = sphi 0, %s20
      %p17 = scmp.ge.s32.totalorder %s16, 4
      %s23 = sphi 0, %s42
      %s24 = sphi 0, %s38
      %s25 = sphi 0, %s34
      %s26 = sphi 0, %s23
      %s27 = sphi 0, %s24
      %s28 = sphi 0, %s25
      %s29 = sphi 0, %s26
      %s30 = sphi 0, %s27
      %s31 = sphi 0, %s28
      %s47 = sphi 0, %s49
      %s50 = sphi 0, %s47
      %s51 = sphi 0, %s50
      %s67 = sphi 0, %s51
      %s75 = sphi 0, %s77
      %s78 = sphi 0, %s75
      %s79 = sphi 0, %s78
      %s95 = sphi 0, %s79
      %s99 = sphi 0, %s99
      %s101 = sphi 0, %s99
      %s102 = sphi 0, %s101
      %s116 = sphi 0, %s102
      %s124 = sphi 0, %s126
      %s127 = sphi 0, %s124
      %s128 = sphi 0, %s127
      %s144 = sphi 0, %s128
    $region4: #{tpu_custom_call.1} parent=1 // loop_header_branch
      %19 = sbr.rel (%p17) target = $region8
    $region5: #{tpu_custom_call.1} parent=1 // loop_body
      %s21 = ssub.s32 %s16, 1
      %s22 = ssub.s32 %s16, 2
      %s32 = sadd.s32 1, %s25
      %p33 = scmp.ge.s32.totalorder %s32, 1
      %s34 = scalar_select %p33, 0, %s32
      %s35 = sadd.s32 1, %s24
      %s36 = scalar_select %p33, %s35, %s24
      %p37 = scmp.ge.s32.totalorder %s36, 1
      %s38 = scalar_select %p37, 0, %s36
      %s39 = sadd.s32 1, %s23
      %s40 = scalar_select %p37, %s39, %s23
      %p41 = scmp.ge.s32.totalorder %s40, 2
      %s42 = scalar_select %p41, 0, %s40
      %s43 = ssub.s32 %s23, %s42
      %s44 = ssub.s32 %s25, %s34
      %s45 = sor.u32 %s43, %s44
      %p46 = scmp.eq.s32.totalorder %s45, 0
      %s48 = sadd.s32 %s47, 1
      %s49 = scalar_select %p46, %s47, %s48
      %p52 = pneg %p46
      %p53 = scmp.eq.s32.totalorder %s16, 1
      %p54 = por %p52, %p53
      %p55 = scmp.ne.s32.totalorder %s47, %s50
      %p56 = scmp.eq.s32.totalorder %s16, 0
      %p57 = por %p55, %p56
      %p58 = scmp.ne.s32.totalorder %s47, %s50
      %p59 = scmp.eq.s32.totalorder %s21, 1
      %p60 = por %p58, %p59
      %p61 = scmp.ne.s32.totalorder %s50, %s51
      %p62 = scmp.eq.s32.totalorder %s21, 0
      %p63 = por %p61, %p62
      %p64 = scmp.ne.s32.totalorder %s50, %s51
      %p65 = scmp.eq.s32.totalorder %s22, 1
      %p66 = por %p64, %p65
      %p68 = scmp.ne.s32.totalorder %s51, %s67
      %p69 = scmp.eq.s32.totalorder %s22, 0
      %p70 = por %p68, %p69
      %s71 = ssub.s32 %s25, %s34
      %s72 = ssub.s32 %s24, %s38
      %s73 = sor.u32 %s71, %s72
      %p74 = scmp.eq.s32.totalorder %s73, 0
      %s76 = sadd.s32 %s75, 1
      %s77 = scalar_select %p74, %s75, %s76
      %p80 = pneg %p74
      %p81 = scmp.eq.s32.totalorder %s16, 1
      %p82 = por %p80, %p81
      %p83 = scmp.ne.s32.totalorder %s75, %s78
      %p84 = scmp.eq.s32.totalorder %s16, 0
      %p85 = por %p83, %p84
      %p86 = scmp.ne.s32.totalorder %s75, %s78
      %p87 = scmp.eq.s32.totalorder %s21, 1
      %p88 = por %p86, %p87
      %p89 = scmp.ne.s32.totalorder %s78, %s79
      %p90 = scmp.eq.s32.totalorder %s21, 0
      %p91 = por %p89, %p90
      %p92 = scmp.ne.s32.totalorder %s78, %s79
      %p93 = scmp.eq.s32.totalorder %s22, 1
      %p94 = por %p92, %p93
      %p96 = scmp.ne.s32.totalorder %s79, %s95
      %p97 = scmp.eq.s32.totalorder %s22, 0
      %p98 = por %p96, %p97
      %s100 = sadd.s32 %s99, 1
      %p103 = scmp.eq.s32.totalorder %s16, 1
      %p104 = scmp.ne.s32.totalorder %s99, %s101
      %p105 = scmp.eq.s32.totalorder %s16, 0
      %p106 = por %p104, %p105
      %p107 = scmp.ne.s32.totalorder %s99, %s101
      %p108 = scmp.eq.s32.totalorder %s21, 1
      %p109 = por %p107, %p108
      %p110 = scmp.ne.s32.totalorder %s101, %s102
      %p111 = scmp.eq.s32.totalorder %s21, 0
      %p112 = por %p110, %p111
      %p113 = scmp.ne.s32.totalorder %s101, %s102
      %p114 = scmp.eq.s32.totalorder %s22, 1
      %p115 = por %p113, %p114
      %p117 = scmp.ne.s32.totalorder %s102, %s116
      %p118 = scmp.eq.s32.totalorder %s22, 0
      %p119 = por %p117, %p118
      %s120 = ssub.s32 %s23, %s42
      %s121 = ssub.s32 %s24, %s38
      %s122 = sor.u32 %s120, %s121
      %p123 = scmp.eq.s32.totalorder %s122, 0
      %s125 = sadd.s32 %s124, 1
      %s126 = scalar_select %p123, %s124, %s125
      %p129 = pneg %p123
      %p130 = scmp.eq.s32.totalorder %s16, 1
      %p131 = por %p129, %p130
      %p132 = scmp.ne.s32.totalorder %s124, %s127
      %p133 = scmp.eq.s32.totalorder %s16, 0
      %p134 = por %p132, %p133
      %p135 = scmp.ne.s32.totalorder %s124, %s127
      %p136 = scmp.eq.s32.totalorder %s21, 1
      %p137 = por %p135, %p136
      %p138 = scmp.ne.s32.totalorder %s127, %s128
      %p139 = scmp.eq.s32.totalorder %s21, 0
      %p140 = por %p138, %p139
      %p141 = scmp.ne.s32.totalorder %s127, %s128
      %p142 = scmp.eq.s32.totalorder %s22, 1
      %p143 = por %p141, %p142
      %p145 = scmp.ne.s32.totalorder %s128, %s144
      %p146 = scmp.eq.s32.totalorder %s22, 0
      %p147 = por %p145, %p146
      %p148 = scmp.le.s32.totalorder 1, %s16
      %p149 = scmp.lt.s32.totalorder %s16, 3
      %p150 = pnand %p148, %p149
      %p151 = pneg %p150
      // Predicated region
      $region9: #{tpu_custom_call.1} parent=5 // pred_check
        _
      $region10: #{tpu_custom_call.1} parent=5 // pred_check_branch
        %153 = sbr.rel (%p150) target = $region12
      $region11: #{tpu_custom_call.1} parent=5 // pred_region
        %s154 = ssub.s32 %s16, 1
        // Predicated region
        $region13: #{tpu_custom_call.1} parent=11 // pred_check
          %p155 = pneg %p91
        $region14: #{tpu_custom_call.1} parent=11 // pred_check_branch
          %157 = sbr.rel (%p155) target = $region16
        $region15: #{tpu_custom_call.1} parent=11 // pred_region
          %s158 = smul.u32 16, %s28
          %s160 = ssub.s32 1024, 1024
          %161 = vsyncadd [#allocation6], %s160
          %s162 = sadd.s32 %s27, %s158
          %s163 = smul.addr %s162, 64
          %s164 = scalar_lea.hbm %s1, %s163
          %s165 = sshll.u32 [#allocation5], 4
          %s166 = int_to_ptr.vmem [resolvable:$true] %s165
          %171 = dma.hbm_to_vmem [thread:$0]  %s164, 1024, %s166, [#allocation6], 64, 64, 4
        $region16: #{tpu_custom_call.1} parent=11 // pred_fallthru
          _
        // Predicated region
        $region17: #{tpu_custom_call.1} parent=11 // pred_check
          %p172 = pneg %p112
        $region18: #{tpu_custom_call.1} parent=11 // pred_check_branch
          %174 = sbr.rel (%p172) target = $region20
        $region19: #{tpu_custom_call.1} parent=11 // pred_region
          _
        $region20: #{tpu_custom_call.1} parent=11 // pred_fallthru
          _
      $region12: #{tpu_custom_call.1} parent=5 // pred_fallthru
        _
      %p175 = scmp.lt.s32.totalorder %s16, 2
      // Predicated region
      $region21: #{tpu_custom_call.1} parent=5 // pred_check
        %p176 = pneg %p175
      $region22: #{tpu_custom_call.1} parent=5 // pred_check_branch
        %178 = sbr.rel (%p176) target = $region24
      $region23: #{tpu_custom_call.1} parent=5 // pred_region
        // Predicated region
        $region25: #{tpu_custom_call.1} parent=23 // pred_check
          %p179 = pneg %p57
        $region26: #{tpu_custom_call.1} parent=23 // pred_check_branch
          %181 = sbr.rel (%p179) target = $region28
        $region27: #{tpu_custom_call.1} parent=23 // pred_region
          %s182 = sand.u32 %s47, 1
          %s183 = scalar_lea.sflag [#allocation3], %s182
          %s184 = sand.u32 %s47, 1
          %s185 = smul.addr %s184, 56
          %s186 = scalar_lea.vmem [#allocation2], %s185
          %s187 = smul.u32 14, %s23
          %s189 = ssub.s32 896, 896
          %190 = vsyncadd %s183, %s189
          %s191 = sadd.s32 %s25, %s187
          %s192 = smul.addr %s191, 64
          %s193 = scalar_lea.hbm %s0, %s192
          %s194 = sshll.u32 %s186, 4
          %s195 = int_to_ptr.vmem [resolvable:$true] %s194
          %200 = dma.hbm_to_vmem [thread:$0]  %s193, 896, %s195, %s183, 64, 64, 4
        $region28: #{tpu_custom_call.1} parent=23 // pred_fallthru
          _
      $region24: #{tpu_custom_call.1} parent=5 // pred_fallthru
        _
      %p201 = scmp.le.s32.totalorder 1, %s16
      %p202 = scmp.lt.s32.totalorder %s16, 3
      %p203 = pnand %p201, %p202
      %p204 = pneg %p203
      // Predicated region
      $region29: #{tpu_custom_call.1} parent=5 // pred_check
        _
      $region30: #{tpu_custom_call.1} parent=5 // pred_check_branch
        %206 = sbr.rel (%p203) target = $region32
      $region31: #{tpu_custom_call.1} parent=5 // pred_region
        %s207 = ssub.s32 %s16, 1
        %s208 = sand.u32 %s50, 1
        %s209 = scalar_lea.sflag [#allocation3], %s208
        %s210 = sand.u32 %s50, 1
        %s211 = smul.addr %s210, 56
        %s212 = scalar_lea.vmem [#allocation2], %s211
        // Predicated region
        $region33: #{tpu_custom_call.1} parent=31 // pred_check
          %p213 = pneg %p63
        $region34: #{tpu_custom_call.1} parent=31 // pred_check_branch
          %215 = sbr.rel (%p213) target = $region36
        $region35: #{tpu_custom_call.1} parent=31 // pred_region
          %216 = dma.done %s209, 896
        $region36: #{tpu_custom_call.1} parent=31 // pred_fallthru
          _
        // Predicated region
        $region37: #{tpu_custom_call.1} parent=31 // pred_check
          %p217 = pneg %p91
        $region38: #{tpu_custom_call.1} parent=31 // pred_check_branch
          %219 = sbr.rel (%p217) target = $region40
        $region39: #{tpu_custom_call.1} parent=31 // pred_region
          %220 = dma.done [#allocation6], 1024
        $region40: #{tpu_custom_call.1} parent=31 // pred_fallthru
          _
        %s221 = sand.u32 %s50, 1
        %s222 = scalar_lea.sflag [#allocation3], %s221
        %s223 = sand.u32 %s50, 1
        %s224 = smul.addr %s223, 56
        %s225 = scalar_lea.vmem [#allocation2], %s224
        %p226 = pneg %p63
        %p227 = pneg %p60
        %p228 = pneg %p91
        %p229 = pneg %p88
        %p230 = pneg %p112
        %p231 = pneg %p109
        %p232 = pneg %p140
        %p233 = pneg %p137
        %s234 = sand.u32 %s127, 1
        %s235 = scalar_lea.sflag [#allocation4], %s234
        %s236 = sand.u32 %s127, 1
        %s237 = smul.addr %s236, 112
        %s238 = scalar_lea.vmem [#allocation7], %s237
        %s239 = smul.u32 14, %s26
        %s240 = smul.u32 16, %s28
        %s241 = smul.u32 14, %s26
        %v243 = vld [vmem:[%s212] sm:$0xf]
        %v244 = vld [vmem:[%s212 + $0x4] sm:$0xf]
        %v245 = vld [vmem:[%s212 + $0x8] sm:$0xf]
        %v246 = vld [vmem:[%s212 + $0xc] sm:$0xf]
        %v247 = vld [vmem:[%s212 + $0x10] sm:$0xf]
        %v248 = vld [vmem:[%s212 + $0x14] sm:$0xf]
        %v249 = vld [vmem:[%s212 + $0x18] sm:$0xf]
        %v250 = vld [vmem:[%s212 + $0x1c] sm:$0xf]
        %v251 = vld [vmem:[%s212 + $0x20] sm:$0xf]
        %v252 = vld [vmem:[%s212 + $0x24] sm:$0xf]
        %v253 = vld [vmem:[%s212 + $0x28] sm:$0xf]
        %v254 = vld [vmem:[%s212 + $0x2c] sm:$0xf]
        %v255 = vld [vmem:[%s212 + $0x30] sm:$0xf]
        %v256 = vld [vmem:[%s212 + $0x34] sm:$0xf]
        %v257 = vld [vmem:[#allocation5] sm:$0xf]
        %v258 = vld [vmem:[#allocation5 + $0x4] sm:$0xf]
        %v259 = vld [vmem:[#allocation5 + $0x8] sm:$0xf]
        %v260 = vld [vmem:[#allocation5 + $0xc] sm:$0xf]
        %v261 = vld [vmem:[#allocation5 + $0x10] sm:$0xf]
        %v262 = vld [vmem:[#allocation5 + $0x14] sm:$0xf]
        %v263 = vld [vmem:[#allocation5 + $0x18] sm:$0xf]
        %v264 = vld [vmem:[#allocation5 + $0x1c] sm:$0xf]
        %v265 = vld [vmem:[#allocation5 + $0x20] sm:$0xf]
        %v266 = vld [vmem:[#allocation5 + $0x24] sm:$0xf]
        %v267 = vld [vmem:[#allocation5 + $0x28] sm:$0xf]
        %v268 = vld [vmem:[#allocation5 + $0x2c] sm:$0xf]
        %v269 = vld [vmem:[#allocation5 + $0x30] sm:$0xf]
        %v270 = vld [vmem:[#allocation5 + $0x34] sm:$0xf]
        %v271 = vld [vmem:[#allocation5 + $0x38] sm:$0xf]
        %v272 = vld [vmem:[#allocation5 + $0x3c] sm:$0xf]
        %v287 = vunpack.c.l.b16 %v243
        %v288 = vunpack.c.l.b16 %v244
        %v289 = vunpack.c.l.b16 %v245
        %v290 = vunpack.c.l.b16 %v246
        %v291 = vunpack.c.l.b16 %v247
        %v292 = vunpack.c.l.b16 %v248
        %v293 = vunpack.c.l.b16 %v249
        %v294 = vunpack.c.l.b16 %v250
        %v295 = vunpack.c.l.b16 %v251
        %v296 = vunpack.c.l.b16 %v252
        %v297 = vunpack.c.l.b16 %v253
        %v298 = vunpack.c.l.b16 %v254
        %v299 = vunpack.c.l.b16 %v255
        %v300 = vunpack.c.l.b16 %v256
        %v301 = vpack.c.b16 %v288, %v287
        %v302 = vpack.c.b16 %v290, %v289
        %v303 = vpack.c.b16 %v292, %v291
        %v304 = vpack.c.b16 %v294, %v293
        %v305 = vpack.c.b16 %v296, %v295
        %v306 = vpack.c.b16 %v298, %v297
        %v307 = vpack.c.b16 %v300, %v299
        %v331 = vunpack.c.l.b16 %v257
        %v332 = vunpack.c.l.b16 %v258
        %v333 = vunpack.c.l.b16 %v259
        %v334 = vunpack.c.l.b16 %v260
        %v335 = vunpack.c.l.b16 %v261
        %v336 = vunpack.c.l.b16 %v262
        %v337 = vunpack.c.l.b16 %v263
        %v338 = vunpack.c.l.b16 %v264
        %v339 = vunpack.c.l.b16 %v265
        %v340 = vunpack.c.l.b16 %v266
        %v341 = vunpack.c.l.b16 %v267
        %v342 = vunpack.c.l.b16 %v268
        %v343 = vunpack.c.l.b16 %v269
        %v344 = vunpack.c.l.b16 %v270
        %v345 = vunpack.c.l.b16 %v271
        %v346 = vunpack.c.l.b16 %v272
        %v347 = vpack.c.b16 %v332, %v331
        %v348 = vpack.c.b16 %v334, %v333
        %v349 = vpack.c.b16 %v336, %v335
        %v350 = vpack.c.b16 %v338, %v337
        %v351 = vpack.c.b16 %v340, %v339
        %v352 = vpack.c.b16 %v342, %v341
        %v353 = vpack.c.b16 %v344, %v343
        %v354 = vpack.c.b16 %v346, %v345
        %363 = vmatprep.subr.bf16.mxu0 0
        %364 = vmatpush1.bf16.msra.mxu0 %v354
        %365 = vmatprep.subr.bf16.mxu0 0
        %366 = vmatpush1.bf16.msra.mxu0 %v353
        %367 = vmatprep.subr.bf16.mxu0 0
        %368 = vmatpush1.bf16.msra.mxu0 %v352
        %369 = vmatprep.subr.bf16.mxu0 0
        %370 = vmatpush1.bf16.msra.mxu0 %v351
        %371 = vmatprep.subr.bf16.mxu0 0
        %372 = vmatpush1.bf16.msra.mxu0 %v350
        %373 = vmatprep.subr.bf16.mxu0 0
        %374 = vmatpush1.bf16.msra.mxu0 %v349
        %375 = vmatprep.subr.bf16.mxu0 0
        %376 = vmatpush1.bf16.msra.mxu0 %v348
        %377 = vmatprep.subr.bf16.mxu0 0
        %378 = vmatpush1.bf16.msra.mxu0 %v347
        %379 = vmatprep.subr.bf16.mxu0 0
        %380 = vmatpush2.bf16.msra.mxu0 0
        %381 = vmatprep.subr.bf16.mxu0 0
        %382 = vmatpush2.bf16.msra.mxu0 0
        %383 = vmatprep.subr.bf16.mxu0 0
        %384 = vmatpush2.bf16.msra.mxu0 0
        %385 = vmatprep.subr.bf16.mxu0 0
        %386 = vmatpush2.bf16.msra.mxu0 0
        %387 = vmatprep.subr.bf16.mxu0 0
        %388 = vmatpush2.bf16.msra.mxu0 0
        %389 = vmatprep.subr.bf16.mxu0 0
        %390 = vmatpush2.bf16.msra.mxu0 0
        %391 = vmatprep.subr.bf16.mxu0 0
        %392 = vmatpush2.bf16.msra.mxu0 0
        %393 = vmatprep.subr.bf16.mxu0 0
        %394 = vmatpush2.bf16.msra.mxu0 0
        %395 = vmatprep.mubr.bf16.mxu0 0
        %396 = vmatmul.mubr.bf16.gmra.mxu0 %v301
        %v397 = vpop.f32.mrf.mxu0
        %v398 = vadd.f32 0.0, %v397
        %v399 = vpop.f32.mrf.mxu0
        %v400 = vpop.f32.mrf.mxu0
        %v401 = vadd.f32 0.0, %v400
        %v402 = vpop.f32.mrf.mxu0
        %403 = vmatprep.mubr.bf16.mxu0 0
        %404 = vmatmul.mubr.bf16.gmra.mxu0 %v302
        %v405 = vpop.f32.mrf.mxu0
        %v406 = vadd.f32 0.0, %v405
        %v407 = vpop.f32.mrf.mxu0
        %v408 = vpop.f32.mrf.mxu0
        %v409 = vadd.f32 0.0, %v408
        %v410 = vpop.f32.mrf.mxu0
        %411 = vmatprep.mubr.bf16.mxu0 0
        %412 = vmatmul.mubr.bf16.gmra.mxu0 %v303
        %v413 = vpop.f32.mrf.mxu0
        %v414 = vadd.f32 0.0, %v413
        %v415 = vpop.f32.mrf.mxu0
        %v416 = vpop.f32.mrf.mxu0
        %v417 = vadd.f32 0.0, %v416
        %v418 = vpop.f32.mrf.mxu0
        %419 = vmatprep.mubr.bf16.mxu0 0
        %420 = vmatmul.mubr.bf16.gmra.mxu0 %v304
        %v421 = vpop.f32.mrf.mxu0
        %v422 = vadd.f32 0.0, %v421
        %v423 = vpop.f32.mrf.mxu0
        %v424 = vpop.f32.mrf.mxu0
        %v425 = vadd.f32 0.0, %v424
        %v426 = vpop.f32.mrf.mxu0
        %427 = vmatprep.mubr.bf16.mxu0 0
        %428 = vmatmul.mubr.bf16.gmra.mxu0 %v305
        %v429 = vpop.f32.mrf.mxu0
        %v430 = vadd.f32 0.0, %v429
        %v431 = vpop.f32.mrf.mxu0
        %v432 = vpop.f32.mrf.mxu0
        %v433 = vadd.f32 0.0, %v432
        %v434 = vpop.f32.mrf.mxu0
        %435 = vmatprep.mubr.bf16.mxu0 0
        %436 = vmatmul.mubr.bf16.gmra.mxu0 %v306
        %v437 = vpop.f32.mrf.mxu0
        %v438 = vadd.f32 0.0, %v437
        %v439 = vpop.f32.mrf.mxu0
        %v440 = vpop.f32.mrf.mxu0
        %v441 = vadd.f32 0.0, %v440
        %v442 = vpop.f32.mrf.mxu0
        %443 = vmatprep.mubr.bf16.mxu0 0
        %444 = vmatmul.mubr.bf16.gmra.mxu0 %v307
        %v445 = vpop.f32.mrf.mxu0
        %v446 = vadd.f32 0.0, %v445
        %v447 = vpop.f32.mrf.mxu0
        %v448 = vpop.f32.mrf.mxu0
        %v449 = vadd.f32 0.0, %v448
        %v450 = vpop.f32.mrf.mxu0
        %451 = vdwg.mxu0
        %p452 = scmp.eq.s32.totalorder %s28, 0
        // Predicated region
        $region41: #{tpu_custom_call.1} parent=31 // pred_check
          %p453 = pneg %p452
        $region42: #{tpu_custom_call.1} parent=31 // pred_check_branch
          %455 = sbr.rel (%p453) target = $region44
        $region43: #{tpu_custom_call.1} parent=31 // pred_region
          %456 = vst [vmem:[%s238] sm:$0xff] %v398
          %457 = vst [vmem:[%s238 + $0x8] sm:$0xff] %v401
          %458 = vst [vmem:[%s238 + $0x10] sm:$0xff] %v406
          %459 = vst [vmem:[%s238 + $0x18] sm:$0xff] %v409
          %460 = vst [vmem:[%s238 + $0x20] sm:$0xff] %v414
          %461 = vst [vmem:[%s238 + $0x28] sm:$0xff] %v417
          %462 = vst [vmem:[%s238 + $0x30] sm:$0xff] %v422
          %463 = vst [vmem:[%s238 + $0x38] sm:$0xff] %v425
          %464 = vst [vmem:[%s238 + $0x40] sm:$0xff] %v430
          %465 = vst [vmem:[%s238 + $0x48] sm:$0xff] %v433
          %466 = vst [vmem:[%s238 + $0x50] sm:$0xff] %v438
          %467 = vst [vmem:[%s238 + $0x58] sm:$0xff] %v441
          %468 = vst [vmem:[%s238 + $0x60] sm:$0xff] %v446
          %469 = vst [vmem:[%s238 + $0x68] sm:$0xff] %v449
        $region44: #{tpu_custom_call.1} parent=31 // pred_fallthru
          _
        %p470 = scmp.ne.s32.totalorder %s28, 0
        // Predicated region
        $region45: #{tpu_custom_call.1} parent=31 // pred_check
          %p471 = pneg %p470
        $region46: #{tpu_custom_call.1} parent=31 // pred_check_branch
          %473 = sbr.rel (%p471) target = $region48
        $region47: #{tpu_custom_call.1} parent=31 // pred_region
          %v474 = vld [vmem:[%s238] sm:$0xff]
          %v475 = vld [vmem:[%s238 + $0x8] sm:$0xff]
          %v476 = vld [vmem:[%s238 + $0x10] sm:$0xff]
          %v477 = vld [vmem:[%s238 + $0x18] sm:$0xff]
          %v478 = vld [vmem:[%s238 + $0x20] sm:$0xff]
          %v479 = vld [vmem:[%s238 + $0x28] sm:$0xff]
          %v480 = vld [vmem:[%s238 + $0x30] sm:$0xff]
          %v481 = vld [vmem:[%s238 + $0x38] sm:$0xff]
          %v482 = vld [vmem:[%s238 + $0x40] sm:$0xff]
          %v483 = vld [vmem:[%s238 + $0x48] sm:$0xff]
          %v484 = vld [vmem:[%s238 + $0x50] sm:$0xff]
          %v485 = vld [vmem:[%s238 + $0x58] sm:$0xff]
          %v486 = vld [vmem:[%s238 + $0x60] sm:$0xff]
          %v487 = vld [vmem:[%s238 + $0x68] sm:$0xff]
          %v488 = vadd.f32 %v474, %v398
          %v489 = vadd.f32 %v475, %v401
          %v490 = vadd.f32 %v476, %v406
          %v491 = vadd.f32 %v477, %v409
          %v492 = vadd.f32 %v478, %v414
          %v493 = vadd.f32 %v479, %v417
          %v494 = vadd.f32 %v480, %v422
          %v495 = vadd.f32 %v481, %v425
          %v496 = vadd.f32 %v482, %v430
          %v497 = vadd.f32 %v483, %v433
          %v498 = vadd.f32 %v484, %v438
          %v499 = vadd.f32 %v485, %v441
          %v500 = vadd.f32 %v486, %v446
          %v501 = vadd.f32 %v487, %v449
          %502 = vst [vmem:[%s238] sm:$0xff] %v488
          %503 = vst [vmem:[%s238 + $0x8] sm:$0xff] %v489
          %504 = vst [vmem:[%s238 + $0x10] sm:$0xff] %v490
          %505 = vst [vmem:[%s238 + $0x18] sm:$0xff] %v491
          %506 = vst [vmem:[%s238 + $0x20] sm:$0xff] %v492
          %507 = vst [vmem:[%s238 + $0x28] sm:$0xff] %v493
          %508 = vst [vmem:[%s238 + $0x30] sm:$0xff] %v494
          %509 = vst [vmem:[%s238 + $0x38] sm:$0xff] %v495
          %510 = vst [vmem:[%s238 + $0x40] sm:$0xff] %v496
          %511 = vst [vmem:[%s238 + $0x48] sm:$0xff] %v497
          %512 = vst [vmem:[%s238 + $0x50] sm:$0xff] %v498
          %513 = vst [vmem:[%s238 + $0x58] sm:$0xff] %v499
          %514 = vst [vmem:[%s238 + $0x60] sm:$0xff] %v500
          %515 = vst [vmem:[%s238 + $0x68] sm:$0xff] %v501
        $region48: #{tpu_custom_call.1} parent=31 // pred_fallthru
          _
        // Predicated region
        $region49: #{tpu_custom_call.1} parent=31 // pred_check
          %p516 = pneg %p452
        $region50: #{tpu_custom_call.1} parent=31 // pred_check_branch
          %518 = sbr.rel (%p516) target = $region52
        $region51: #{tpu_custom_call.1} parent=31 // pred_region
          %v519 = vld [vmem:[%s238] sm:$0xff]
          %v520 = vld [vmem:[%s238 + $0x8] sm:$0xff]
          %v521 = vld [vmem:[%s238 + $0x10] sm:$0xff]
          %v522 = vld [vmem:[%s238 + $0x18] sm:$0xff]
          %v523 = vld [vmem:[%s238 + $0x20] sm:$0xff]
          %v524 = vld [vmem:[%s238 + $0x28] sm:$0xff]
          %v525 = vld [vmem:[%s238 + $0x30] sm:$0xff]
          %v526 = vld [vmem:[%s238 + $0x38] sm:$0xff]
          %v527 = vld [vmem:[%s238 + $0x40] sm:$0xff]
          %v528 = vld [vmem:[%s238 + $0x48] sm:$0xff]
          %v529 = vld [vmem:[%s238 + $0x50] sm:$0xff]
          %v530 = vld [vmem:[%s238 + $0x58] sm:$0xff]
          %v531 = vld [vmem:[%s238 + $0x60] sm:$0xff]
          %v532 = vld [vmem:[%s238 + $0x68] sm:$0xff]
          %v533 = vld [vmem:[%s2] sm:$0x1]
          %v535 = vlaneseq
          %v536 = vshrl.u32 %v535, 7
          %v537 = vsub.s32 0, %v536
          %v538 = vrot.slane %v533, %v537
          %v540 = vadd.f32 %v519, %v538
          %v541 = vadd.f32 %v520, %v538
          %v542 = vadd.f32 %v521, %v538
          %v543 = vadd.f32 %v522, %v538
          %v544 = vadd.f32 %v523, %v538
          %v545 = vadd.f32 %v524, %v538
          %v546 = vadd.f32 %v525, %v538
          %v547 = vadd.f32 %v526, %v538
          %v548 = vadd.f32 %v527, %v538
          %v549 = vadd.f32 %v528, %v538
          %v550 = vadd.f32 %v529, %v538
          %v551 = vadd.f32 %v530, %v538
          %v552 = vadd.f32 %v531, %v538
          %v553 = vadd.f32 %v532, %v538
          %554 = vst [vmem:[%s238] sm:$0xff] %v540
          %555 = vst [vmem:[%s238 + $0x8] sm:$0xff] %v541
          %556 = vst [vmem:[%s238 + $0x10] sm:$0xff] %v542
          %557 = vst [vmem:[%s238 + $0x18] sm:$0xff] %v543
          %558 = vst [vmem:[%s238 + $0x20] sm:$0xff] %v544
          %559 = vst [vmem:[%s238 + $0x28] sm:$0xff] %v545
          %560 = vst [vmem:[%s238 + $0x30] sm:$0xff] %v546
          %561 = vst [vmem:[%s238 + $0x38] sm:$0xff] %v547
          %562 = vst [vmem:[%s238 + $0x40] sm:$0xff] %v548
          %563 = vst [vmem:[%s238 + $0x48] sm:$0xff] %v549
          %564 = vst [vmem:[%s238 + $0x50] sm:$0xff] %v550
          %565 = vst [vmem:[%s238 + $0x58] sm:$0xff] %v551
          %566 = vst [vmem:[%s238 + $0x60] sm:$0xff] %v552
          %567 = vst [vmem:[%s238 + $0x68] sm:$0xff] %v553
        $region52: #{tpu_custom_call.1} parent=31 // pred_fallthru
          _
        %s568 = sand.u32 %s127, 1
        %s569 = scalar_lea.sflag [#allocation4], %s568
        %s570 = sand.u32 %s127, 1
        %s571 = smul.addr %s570, 112
        %s572 = scalar_lea.vmem [#allocation7], %s571
        // Predicated region
        $region53: #{tpu_custom_call.1} parent=31 // pred_check
          %p573 = pneg %p137
        $region54: #{tpu_custom_call.1} parent=31 // pred_check_branch
          %575 = sbr.rel (%p573) target = $region56
        $region55: #{tpu_custom_call.1} parent=31 // pred_region
          %s576 = smul.u32 14, %s26
          %s578 = ssub.s32 1792, 1792
          %579 = vsyncadd %s569, %s578
          %s580 = sadd.s32 %s27, %s576
          %s581 = smul.addr %s580, 128
          %s582 = scalar_lea.hbm %s3, %s581
          %s583 = sshll.u32 %s572, 4
          %s584 = int_to_ptr.vmem [resolvable:$true] %s583
          %589 = dma.vmem_to_hbm [thread:$0]  %s584, 1792, %s582, %s569, 128, 128, 8
        $region56: #{tpu_custom_call.1} parent=31 // pred_fallthru
          _
      $region32: #{tpu_custom_call.1} parent=5 // pred_fallthru
        _
      %p590 = scmp.le.s32.totalorder 2, %s16
      // Predicated region
      $region57: #{tpu_custom_call.1} parent=5 // pred_check
        %p591 = pneg %p590
      $region58: #{tpu_custom_call.1} parent=5 // pred_check_branch
        %593 = sbr.rel (%p591) target = $region60
      $region59: #{tpu_custom_call.1} parent=5 // pred_region
        %s594 = ssub.s32 %s16, 2
        // Predicated region
        $region61: #{tpu_custom_call.1} parent=59 // pred_check
          %p595 = pneg %p143
        $region62: #{tpu_custom_call.1} parent=59 // pred_check_branch
          %597 = sbr.rel (%p595) target = $region64
        $region63: #{tpu_custom_call.1} parent=59 // pred_region
          %s598 = sand.u32 %s128, 1
          %s599 = scalar_lea.sflag [#allocation4], %s598
          %s600 = sand.u32 %s128, 1
          %s601 = smul.addr %s600, 112
          %s602 = scalar_lea.vmem [#allocation7], %s601
          %603 = dma.done %s599, 1792
        $region64: #{tpu_custom_call.1} parent=59 // pred_fallthru
          _
      $region60: #{tpu_custom_call.1} parent=5 // pred_fallthru
        _
    $region6: #{tpu_custom_call.1} parent=1 // loop_footer
      %s20 = sadd.s32 1, %s16
    $region7: #{tpu_custom_call.1} parent=1 // loop_footer_branch
      %15 = sbr.rel target = $region3
    $region8: #{tpu_custom_call.1} parent=1 // loop_exit
      _
    %604 = vsyncpa [#allocation3], 1
    %s605 = scalar_lea.sflag [#allocation3], 1
    %606 = vsyncpa %s605, 1
    %607 = vsyncpa [#allocation6], 1
    %608 = vsyncpa [#allocation4], 1
    %s609 = scalar_lea.sflag [#allocation4], 1
    %610 = vsyncpa %s609, 1

</llo_original>
